<compile_context>
chip_gen: v7x
topology: tpu7x:2x2x1
jax: 0.10.0
libtpu: 0.0.40
codegen_flags: <defaults>
</compile_context>

<pallas_src>
import jax
import jax.numpy as jnp
from jax.experimental import pallas as pl
from jax.experimental.pallas import tpu as pltpu


LEAKY_SLOPE = 0.01  # torch.nn.functional.leaky_relu default negative_slope


def _round_up(x, m):
    return (x + m - 1) // m * m


def _leaky_relu(h):
    return jnp.where(h > 0, h, LEAKY_SLOPE * h)


def _choose_tile_m(B, max_tile_m=1024):
    """Largest batch tile with <=12.5% row-padding waste; then ensure the
    'parallel' grid has >=2 steps (v7x megacore) when the batch allows it."""
    b8 = _round_up(max(B, 1), 8)
    tile = 8
    for t in (1024, 512, 256, 128, 64, 32, 16, 8):
        if t > max_tile_m:
            continue
        if _round_up(b8, t) - b8 <= b8 // 8:
            tile = t
            break
    while tile > 8 and (_round_up(b8, tile) // tile) < 2:
        tile //= 2
    return tile


def plan_tiling(B, dims, max_tile_m=1024):
    input_dim, hidden_dim, latent_dim = dims
    tile_m = _choose_tile_m(B, max_tile_m)
    b_pad = _round_up(_round_up(B, 8), tile_m)
    return {
        "tile_m": tile_m,
        "b_pad": b_pad,
        "in_pad": _round_up(input_dim, 128),
        "hid_pad": _round_up(hidden_dim, 128),
        "lat_pad": _round_up(latent_dim, 128),
    }


def vae_kernel(
    x_ref, eps_ref,
    we1_ref, be1_ref, we2_ref, be2_ref, we34_ref, be34_ref,
    wd1_ref, bd1_ref, wd2_ref, bd2_ref, wd3_ref, bd3_ref,
    out_ref, mlv_ref,
):
    bf16 = jnp.bfloat16
    f32 = jnp.float32
    lat_pad = eps_ref.shape[-1]

    # ---- Encoder ----
    x = x_ref[...]                                   # already bf16
    h = jnp.dot(x, we1_ref[...], preferred_element_type=f32) + be1_ref[...]
    h = _leaky_relu(h)
    h = jnp.dot(h.astype(bf16), we2_ref[...], preferred_element_type=f32) + be2_ref[...]
    h = _leaky_relu(h)

    # Fused mean|logvar heads: one 256-wide matmul, one packed output stream.
    mlv = jnp.dot(h.astype(bf16), we34_ref[...], preferred_element_type=f32) + be34_ref[...]
    mlv_ref[...] = mlv
    mean = mlv[:, :lat_pad]            # static, 128-lane aligned slices
    logvar = mlv[:, lat_pad:]

    # ---- Reparameterization (eps supplied by caller, bf16 padded noise) ----
    z = mean + jnp.exp(0.5 * logvar) * eps_ref[...].astype(f32)

    # ---- Decoder ----
    h = jnp.dot(z.astype(bf16), wd1_ref[...], preferred_element_type=f32) + bd1_ref[...]
    h = _leaky_relu(h)
    h = jnp.dot(h.astype(bf16), wd2_ref[...], preferred_element_type=f32) + bd2_ref[...]
    h = _leaky_relu(h)
    h = jnp.dot(h.astype(bf16), wd3_ref[...], preferred_element_type=f32) + bd3_ref[...]
    out_ref[...] = jax.nn.sigmoid(h).astype(out_ref.dtype)


def vae_forward(x, eps, params, dims, max_tile_m=1024):
    """x: (B, input_dim). eps: either logical (B, latent_dim) noise or already
    lane/row-padded (b_pad, lat_pad) noise (preferred: no wrapper-side pad op).
    params: dict from make_vae_params. Returns (output, mean, log_variance) at
    logical sizes; output is bf16, mean/logvar f32."""
    input_dim, hidden_dim, latent_dim = dims
    B = x.shape[0]
    plan = plan_tiling(B, dims, max_tile_m)
    tile_m, b_pad = plan["tile_m"], plan["b_pad"]
    in_pad, lat_pad = plan["in_pad"], plan["lat_pad"]
    out_pad = in_pad  # decoder reconstructs input_dim features

    # x stream in bf16 (half the HBM bytes of the largest input).
    x_p = jnp.zeros((b_pad, in_pad), jnp.bfloat16).at[:B, :input_dim].set(
        x.astype(jnp.bfloat16))

    if eps.shape == (b_pad, lat_pad):
        eps_p = eps.astype(jnp.bfloat16)          # already padded: no extra op
    else:
        eps_p = jnp.zeros((b_pad, lat_pad), jnp.bfloat16).at[:B, :latent_dim].set(
            eps.astype(jnp.bfloat16))

    grid = (b_pad // tile_m,)

    def row_spec(n):
        return pl.BlockSpec((tile_m, n), lambda i: (i, 0))

    def const_spec(shape):
        return pl.BlockSpec(shape, lambda i: (0, 0))

    weight_names = ("we1", "be1", "we2", "be2", "we34", "be34",
                    "wd1", "bd1", "wd2", "bd2", "wd3", "bd3")
    weight_args = [params[k] for k in weight_names]

    out_p, mlv_p = pl.pallas_call(
        vae_kernel,
        out_shape=(
            jax.ShapeDtypeStruct((b_pad, out_pad), jnp.bfloat16),
            jax.ShapeDtypeStruct((b_pad, 2 * lat_pad), jnp.float32),
        ),
        grid=grid,
        in_specs=[row_spec(in_pad), row_spec(lat_pad)]
        + [const_spec(a.shape) for a in weight_args],
        out_specs=[row_spec(out_pad), row_spec(2 * lat_pad)],
        compiler_params=pltpu.CompilerParams(
            dimension_semantics=("parallel",)),
    )(x_p, eps_p, *weight_args)

    out = out_p[:B, :input_dim]
    mean = mlv_p[:B, :latent_dim]
    logvar = mlv_p[:B, lat_pad:lat_pad + latent_dim]
    return out, mean, logvar


def make_vae_params(key, input_dim, hidden_dim, latent_dim):
    """Torch-Linear-like uniform init, stored lane-padded.
    Weights are (in, out) (torch (out, in) transposed) in bf16, zero-padded to
    multiples of 128 on both axes; biases are (1, out) f32, zero-padded.
    The two latent heads e3/e4 are packed side-by-side into we34/be34."""
    in_pad = _round_up(input_dim, 128)
    hid_pad = _round_up(hidden_dim, 128)
    lat_pad = _round_up(latent_dim, 128)

    keys = list(jax.random.split(key, 14))
    it = iter(keys)

    def linear(fan_in, fan_out, fin_pad, fout_pad):
        bound = 1.0 / (fan_in ** 0.5)
        w = jax.random.uniform(next(it), (fan_in, fan_out), jnp.float32, -bound, bound)
        b = jax.random.uniform(next(it), (1, fan_out), jnp.float32, -bound, bound)
        w_p = jnp.zeros((fin_pad, fout_pad), jnp.bfloat16)
        w_p = w_p.at[:fan_in, :fan_out].set(w.astype(jnp.bfloat16))
        b_p = jnp.zeros((1, fout_pad), jnp.float32).at[:, :fan_out].set(b)
        return w_p, b_p

    p = {}
    p["we1"], p["be1"] = linear(input_dim, hidden_dim, in_pad, hid_pad)
    p["we2"], p["be2"] = linear(hidden_dim, hidden_dim, hid_pad, hid_pad)
    w3, b3 = linear(hidden_dim, latent_dim, hid_pad, lat_pad)
    w4, b4 = linear(hidden_dim, latent_dim, hid_pad, lat_pad)
    p["we34"] = jnp.concatenate([w3, w4], axis=1)       # (hid_pad, 2*lat_pad)
    p["be34"] = jnp.concatenate([b3, b4], axis=1)       # (1, 2*lat_pad)
    p["wd1"], p["bd1"] = linear(latent_dim, hidden_dim, lat_pad, hid_pad)
    p["wd2"], p["bd2"] = linear(hidden_dim, hidden_dim, hid_pad, hid_pad)
    p["wd3"], p["bd3"] = linear(hidden_dim, input_dim, hid_pad, in_pad)
    return p


def vae_reference(x, eps, params, dims):
    """Pure-JAX reference matching the PyTorch VAE.forward semantics, using the
    same (bf16-rounded) weights and the same bf16-rounded x / eps values, with
    f32 math throughout."""
    input_dim, hidden_dim, latent_dim = dims
    lat_pad = _round_up(latent_dim, 128)

    def lin(h, wk, bk, din, dout, col_off=0):
        w = params[wk][:din, col_off:col_off + dout].astype(jnp.float32)
        b = params[bk][:, col_off:col_off + dout]
        return h @ w + b

    x32 = x.astype(jnp.bfloat16).astype(jnp.float32)
    eps32 = eps.astype(jnp.bfloat16).astype(jnp.float32)

    h = _leaky_relu(lin(x32, "we1", "be1", input_dim, hidden_dim))
    h = _leaky_relu(lin(h, "we2", "be2", hidden_dim, hidden_dim))
    mean = lin(h, "we34", "be34", hidden_dim, latent_dim, col_off=0)
    logvar = lin(h, "we34", "be34", hidden_dim, latent_dim, col_off=lat_pad)
    z = mean + jnp.exp(0.5 * logvar) * eps32
    h = _leaky_relu(lin(z, "wd1", "bd1", latent_dim, hidden_dim))
    h = _leaky_relu(lin(h, "wd2", "bd2", hidden_dim, hidden_dim))
    out = jax.nn.sigmoid(lin(h, "wd3", "bd3", hidden_dim, input_dim))
    return out, mean, logvar


if __name__ == "__main__":
    input_dim, hidden_dim, latent_dim = 64, 32, 8
    batch = 8
    dims = (input_dim, hidden_dim, latent_dim)

    key = jax.random.PRNGKey(0)
    k_x, k_eps, k_p = jax.random.split(key, 3)

    x = jax.random.normal(k_x, (batch, input_dim), jnp.float32)
    params = make_vae_params(k_p, input_dim, hidden_dim, latent_dim)

    # epsilon of the reparameterization trick (torch.randn_like): generated
    # host-side, DIRECTLY at the padded (b_pad, lat_pad) bf16 layout so the
    # kernel sees no wrapper-side pad round-trip for the noise stream.
    plan = plan_tiling(batch, dims)
    eps_p = jax.random.normal(k_eps, (plan["b_pad"], plan["lat_pad"]), jnp.bfloat16)

    out, mean, logvar = vae_forward(x, eps_p, params, dims)
    out, mean, logvar = jax.block_until_ready((out, mean, logvar))

    eps_logical = eps_p[:batch, :latent_dim]
    ref_out, ref_mean, ref_logvar = vae_reference(x, eps_logical, params, dims)

    assert out.shape == (batch, input_dim), out.shape
    assert mean.shape == (batch, latent_dim), mean.shape
    assert logvar.shape == (batch, latent_dim), logvar.shape
    assert jnp.allclose(out.astype(jnp.float32), ref_out, atol=2e-2, rtol=2e-2), "output mismatch"
    assert jnp.allclose(mean, ref_mean, atol=2e-2, rtol=2e-2), "mean mismatch"
    assert jnp.allclose(logvar, ref_logvar, atol=2e-2, rtol=2e-2), "logvar mismatch"

    print("KERNEL_OK")
</pallas_src>

<mosaic_0001>
module attributes {stable_mosaic.version = 11 : i64} {
  func.func @vae_kernel(%arg0: i32, %arg1: memref<8x128xbf16, #tpu.memory_space<vmem>>, %arg2: memref<8x128xbf16, #tpu.memory_space<vmem>>, %arg3: memref<128x128xbf16, #tpu.memory_space<vmem>>, %arg4: memref<1x128xf32, #tpu.memory_space<vmem>>, %arg5: memref<128x128xbf16, #tpu.memory_space<vmem>>, %arg6: memref<1x128xf32, #tpu.memory_space<vmem>>, %arg7: memref<128x256xbf16, #tpu.memory_space<vmem>>, %arg8: memref<1x256xf32, #tpu.memory_space<vmem>>, %arg9: memref<128x128xbf16, #tpu.memory_space<vmem>>, %arg10: memref<1x128xf32, #tpu.memory_space<vmem>>, %arg11: memref<128x128xbf16, #tpu.memory_space<vmem>>, %arg12: memref<1x128xf32, #tpu.memory_space<vmem>>, %arg13: memref<128x128xbf16, #tpu.memory_space<vmem>>, %arg14: memref<1x128xf32, #tpu.memory_space<vmem>>, %arg15: memref<8x128xbf16, #tpu.memory_space<vmem>>, %arg16: memref<8x256xf32, #tpu.memory_space<vmem>>) attributes {dimension_semantics = [#tpu.dimension_semantics<parallel>], iteration_bounds = array<i64: 1>, scalar_prefetch = 0 : i64, scratch_operands = 0 : i64, tpu.core_type = #tpu.core_type<tc>, window_params = [{transform_indices = @transform_0, window_bounds = array<i64: 8, 128>}, {transform_indices = @transform_1, window_bounds = array<i64: 8, 128>}, {pipeline_mode = #tpu.pipeline_mode<synchronous>, transform_indices = @transform_2, window_bounds = array<i64: 128, 128>}, {pipeline_mode = #tpu.pipeline_mode<synchronous>, transform_indices = @transform_3, window_bounds = array<i64: 1, 128>}, {pipeline_mode = #tpu.pipeline_mode<synchronous>, transform_indices = @transform_4, window_bounds = array<i64: 128, 128>}, {pipeline_mode = #tpu.pipeline_mode<synchronous>, transform_indices = @transform_5, window_bounds = array<i64: 1, 128>}, {pipeline_mode = #tpu.pipeline_mode<synchronous>, transform_indices = @transform_6, window_bounds = array<i64: 128, 256>}, {pipeline_mode = #tpu.pipeline_mode<synchronous>, transform_indices = @transform_7, window_bounds = array<i64: 1, 256>}, {pipeline_mode = #tpu.pipeline_mode<synchronous>, transform_indices = @transform_8, window_bounds = array<i64: 128, 128>}, {pipeline_mode = #tpu.pipeline_mode<synchronous>, transform_indices = @transform_9, window_bounds = array<i64: 1, 128>}, {pipeline_mode = #tpu.pipeline_mode<synchronous>, transform_indices = @transform_10, window_bounds = array<i64: 128, 128>}, {pipeline_mode = #tpu.pipeline_mode<synchronous>, transform_indices = @transform_11, window_bounds = array<i64: 1, 128>}, {pipeline_mode = #tpu.pipeline_mode<synchronous>, transform_indices = @transform_12, window_bounds = array<i64: 128, 128>}, {pipeline_mode = #tpu.pipeline_mode<synchronous>, transform_indices = @transform_13, window_bounds = array<i64: 1, 128>}, {transform_indices = @transform_14, window_bounds = array<i64: 8, 128>}, {transform_indices = @transform_15, window_bounds = array<i64: 8, 256>}]} {
    %c0 = arith.constant 0 : index
    %c0_0 = arith.constant 0 : index
    %0 = vector.load %arg1[%c0, %c0_0] : memref<8x128xbf16, #tpu.memory_space<vmem>>, vector<8x128xbf16>
    %c0_1 = arith.constant 0 : index
    %c0_2 = arith.constant 0 : index
    %1 = vector.load %arg3[%c0_1, %c0_2] : memref<128x128xbf16, #tpu.memory_space<vmem>>, vector<128x128xbf16>
    %cst = arith.constant dense<0.000000e+00> : vector<8x128xf32>
    %2 = tpu.matmul %0, %1, %cst {dimension_numbers = #tpu.dot_dimension_numbers<[1], [0], [0], [1], [0, 0, 1, 1], [], []>} : vector<8x128xbf16>, vector<128x128xbf16>, vector<8x128xf32> -> vector<8x128xf32>
    %c0_3 = arith.constant 0 : index
    %c0_4 = arith.constant 0 : index
    %3 = vector.load %arg4[%c0_3, %c0_4] : memref<1x128xf32, #tpu.memory_space<vmem>>, vector<1x128xf32>
    %4 = vector.broadcast %3 : vector<1x128xf32> to vector<8x128xf32>
    %5 = arith.addf %2, %4 : vector<8x128xf32>
    %cst_5 = arith.constant 0.000000e+00 : f32
    %6 = vector.broadcast %cst_5 : f32 to vector<8x128xf32>
    %7 = arith.cmpf ogt, %5, %6 : vector<8x128xf32>
    %cst_6 = arith.constant 0.00999999977 : f32
    %8 = vector.broadcast %cst_6 : f32 to vector<8x128xf32>
    %9 = arith.mulf %8, %5 : vector<8x128xf32>
    %10 = arith.select %7, %5, %9 : vector<8x128xi1>, vector<8x128xf32>
    %11 = arith.truncf %10 : vector<8x128xf32> to vector<8x128xbf16>
    %c0_7 = arith.constant 0 : index
    %c0_8 = arith.constant 0 : index
    %12 = vector.load %arg5[%c0_7, %c0_8] : memref<128x128xbf16, #tpu.memory_space<vmem>>, vector<128x128xbf16>
    %cst_9 = arith.constant dense<0.000000e+00> : vector<8x128xf32>
    %13 = tpu.matmul %11, %12, %cst_9 {dimension_numbers = #tpu.dot_dimension_numbers<[1], [0], [0], [1], [0, 0, 1, 1], [], []>} : vector<8x128xbf16>, vector<128x128xbf16>, vector<8x128xf32> -> vector<8x128xf32>
    %c0_10 = arith.constant 0 : index
    %c0_11 = arith.constant 0 : index
    %14 = vector.load %arg6[%c0_10, %c0_11] : memref<1x128xf32, #tpu.memory_space<vmem>>, vector<1x128xf32>
    %15 = vector.broadcast %14 : vector<1x128xf32> to vector<8x128xf32>
    %16 = arith.addf %13, %15 : vector<8x128xf32>
    %cst_12 = arith.constant 0.000000e+00 : f32
    %17 = vector.broadcast %cst_12 : f32 to vector<8x128xf32>
    %18 = arith.cmpf ogt, %16, %17 : vector<8x128xf32>
    %cst_13 = arith.constant 0.00999999977 : f32
    %19 = vector.broadcast %cst_13 : f32 to vector<8x128xf32>
    %20 = arith.mulf %19, %16 : vector<8x128xf32>
    %21 = arith.select %18, %16, %20 : vector<8x128xi1>, vector<8x128xf32>
    %22 = arith.truncf %21 : vector<8x128xf32> to vector<8x128xbf16>
    %c0_14 = arith.constant 0 : index
    %c0_15 = arith.constant 0 : index
    %23 = vector.load %arg7[%c0_14, %c0_15] : memref<128x256xbf16, #tpu.memory_space<vmem>>, vector<128x256xbf16>
    %cst_16 = arith.constant dense<0.000000e+00> : vector<8x256xf32>
    %24 = tpu.matmul %22, %23, %cst_16 {dimension_numbers = #tpu.dot_dimension_numbers<[1], [0], [0], [1], [0, 0, 1, 1], [], []>} : vector<8x128xbf16>, vector<128x256xbf16>, vector<8x256xf32> -> vector<8x256xf32>
    %c0_17 = arith.constant 0 : index
    %c0_18 = arith.constant 0 : index
    %25 = vector.load %arg8[%c0_17, %c0_18] : memref<1x256xf32, #tpu.memory_space<vmem>>, vector<1x256xf32>
    %26 = vector.broadcast %25 : vector<1x256xf32> to vector<8x256xf32>
    %27 = arith.addf %24, %26 : vector<8x256xf32>
    %c0_19 = arith.constant 0 : index
    %c0_20 = arith.constant 0 : index
    %28 = vector.load %arg16[%c0_19, %c0_20] : memref<8x256xf32, #tpu.memory_space<vmem>>, vector<8x256xf32>
    tpu.vector_store %arg16[%c0_19, %c0_20], %27 {strides = array<i32>} : memref<8x256xf32, #tpu.memory_space<vmem>>, vector<8x256xf32>,
    %29 = vector.extract_strided_slice %27 {offsets = [0, 0], sizes = [8, 128], strides = [1, 1]} : vector<8x256xf32> to vector<8x128xf32>
    %30 = vector.extract_strided_slice %27 {offsets = [0, 128], sizes = [8, 128], strides = [1, 1]} : vector<8x256xf32> to vector<8x128xf32>
    %cst_21 = arith.constant 5.000000e-01 : f32
    %31 = vector.broadcast %cst_21 : f32 to vector<8x128xf32>
    %32 = arith.mulf %31, %30 : vector<8x128xf32>
    %33 = math.exp %32 : vector<8x128xf32>
    %c0_22 = arith.constant 0 : index
    %c0_23 = arith.constant 0 : index
    %34 = vector.load %arg2[%c0_22, %c0_23] : memref<8x128xbf16, #tpu.memory_space<vmem>>, vector<8x128xbf16>
    %35 = arith.extf %34 : vector<8x128xbf16> to vector<8x128xf32>
    %36 = arith.mulf %33, %35 : vector<8x128xf32>
    %37 = arith.addf %29, %36 : vector<8x128xf32>
    %38 = arith.truncf %37 : vector<8x128xf32> to vector<8x128xbf16>
    %c0_24 = arith.constant 0 : index
    %c0_25 = arith.constant 0 : index
    %39 = vector.load %arg9[%c0_24, %c0_25] : memref<128x128xbf16, #tpu.memory_space<vmem>>, vector<128x128xbf16>
    %cst_26 = arith.constant dense<0.000000e+00> : vector<8x128xf32>
    %40 = tpu.matmul %38, %39, %cst_26 {dimension_numbers = #tpu.dot_dimension_numbers<[1], [0], [0], [1], [0, 0, 1, 1], [], []>} : vector<8x128xbf16>, vector<128x128xbf16>, vector<8x128xf32> -> vector<8x128xf32>
    %c0_27 = arith.constant 0 : index
    %c0_28 = arith.constant 0 : index
    %41 = vector.load %arg10[%c0_27, %c0_28] : memref<1x128xf32, #tpu.memory_space<vmem>>, vector<1x128xf32>
    %42 = vector.broadcast %41 : vector<1x128xf32> to vector<8x128xf32>
    %43 = arith.addf %40, %42 : vector<8x128xf32>
    %cst_29 = arith.constant 0.000000e+00 : f32
    %44 = vector.broadcast %cst_29 : f32 to vector<8x128xf32>
    %45 = arith.cmpf ogt, %43, %44 : vector<8x128xf32>
    %cst_30 = arith.constant 0.00999999977 : f32
    %46 = vector.broadcast %cst_30 : f32 to vector<8x128xf32>
    %47 = arith.mulf %46, %43 : vector<8x128xf32>
    %48 = arith.select %45, %43, %47 : vector<8x128xi1>, vector<8x128xf32>
    %49 = arith.truncf %48 : vector<8x128xf32> to vector<8x128xbf16>
    %c0_31 = arith.constant 0 : index
    %c0_32 = arith.constant 0 : index
    %50 = vector.load %arg11[%c0_31, %c0_32] : memref<128x128xbf16, #tpu.memory_space<vmem>>, vector<128x128xbf16>
    %cst_33 = arith.constant dense<0.000000e+00> : vector<8x128xf32>
    %51 = tpu.matmul %49, %50, %cst_33 {dimension_numbers = #tpu.dot_dimension_numbers<[1], [0], [0], [1], [0, 0, 1, 1], [], []>} : vector<8x128xbf16>, vector<128x128xbf16>, vector<8x128xf32> -> vector<8x128xf32>
    %c0_34 = arith.constant 0 : index
    %c0_35 = arith.constant 0 : index
    %52 = vector.load %arg12[%c0_34, %c0_35] : memref<1x128xf32, #tpu.memory_space<vmem>>, vector<1x128xf32>
    %53 = vector.broadcast %52 : vector<1x128xf32> to vector<8x128xf32>
    %54 = arith.addf %51, %53 : vector<8x128xf32>
    %cst_36 = arith.constant 0.000000e+00 : f32
    %55 = vector.broadcast %cst_36 : f32 to vector<8x128xf32>
    %56 = arith.cmpf ogt, %54, %55 : vector<8x128xf32>
    %cst_37 = arith.constant 0.00999999977 : f32
    %57 = vector.broadcast %cst_37 : f32 to vector<8x128xf32>
    %58 = arith.mulf %57, %54 : vector<8x128xf32>
    %59 = arith.select %56, %54, %58 : vector<8x128xi1>, vector<8x128xf32>
    %60 = arith.truncf %59 : vector<8x128xf32> to vector<8x128xbf16>
    %c0_38 = arith.constant 0 : index
    %c0_39 = arith.constant 0 : index
    %61 = vector.load %arg13[%c0_38, %c0_39] : memref<128x128xbf16, #tpu.memory_space<vmem>>, vector<128x128xbf16>
    %cst_40 = arith.constant dense<0.000000e+00> : vector<8x128xf32>
    %62 = tpu.matmul %60, %61, %cst_40 {dimension_numbers = #tpu.dot_dimension_numbers<[1], [0], [0], [1], [0, 0, 1, 1], [], []>} : vector<8x128xbf16>, vector<128x128xbf16>, vector<8x128xf32> -> vector<8x128xf32>
    %c0_41 = arith.constant 0 : index
    %c0_42 = arith.constant 0 : index
    %63 = vector.load %arg14[%c0_41, %c0_42] : memref<1x128xf32, #tpu.memory_space<vmem>>, vector<1x128xf32>
    %64 = vector.broadcast %63 : vector<1x128xf32> to vector<8x128xf32>
    %65 = arith.addf %62, %64 : vector<8x128xf32>
    %66 = arith.negf %65 : vector<8x128xf32>
    %67 = math.exp %66 : vector<8x128xf32>
    %cst_43 = arith.constant 1.000000e+00 : f32
    %68 = vector.broadcast %cst_43 : f32 to vector<8x128xf32>
    %69 = arith.addf %68, %67 : vector<8x128xf32>
    %70 = arith.divf %68, %69 : vector<8x128xf32>
    %71 = arith.truncf %70 : vector<8x128xf32> to vector<8x128xbf16>
    %c0_44 = arith.constant 0 : index
    %c0_45 = arith.constant 0 : index
    %72 = vector.load %arg15[%c0_44, %c0_45] : memref<8x128xbf16, #tpu.memory_space<vmem>>, vector<8x128xbf16>
    tpu.vector_store %arg15[%c0_44, %c0_45], %71 {strides = array<i32>} : memref<8x128xbf16, #tpu.memory_space<vmem>>, vector<8x128xbf16>,
    return
  }
  func.func @transform_0(%arg0: i32) -> (i32, i32) {
    %c0_i32 = arith.constant 0 : i32
    %c0_i32_0 = arith.constant 0 : i32
    return %arg0, %c0_i32 : i32, i32
  }
  func.func @transform_1(%arg0: i32) -> (i32, i32) {
    %c0_i32 = arith.constant 0 : i32
    %c0_i32_0 = arith.constant 0 : i32
    return %arg0, %c0_i32 : i32, i32
  }
  func.func @transform_2(%arg0: i32) -> (i32, i32) {
    %c0_i32 = arith.constant 0 : i32
    %c0_i32_0 = arith.constant 0 : i32
    %c0_i32_1 = arith.constant 0 : i32
    return %c0_i32, %c0_i32_0 : i32, i32
  }
  func.func @transform_3(%arg0: i32) -> (i32, i32) {
    %c0_i32 = arith.constant 0 : i32
    %c0_i32_0 = arith.constant 0 : i32
    %c0_i32_1 = arith.constant 0 : i32
    return %c0_i32, %c0_i32_0 : i32, i32
  }
  func.func @transform_4(%arg0: i32) -> (i32, i32) {
    %c0_i32 = arith.constant 0 : i32
    %c0_i32_0 = arith.constant 0 : i32
    %c0_i32_1 = arith.constant 0 : i32
    return %c0_i32, %c0_i32_0 : i32, i32
  }
  func.func @transform_5(%arg0: i32) -> (i32, i32) {
    %c0_i32 = arith.constant 0 : i32
    %c0_i32_0 = arith.constant 0 : i32
    %c0_i32_1 = arith.constant 0 : i32
    return %c0_i32, %c0_i32_0 : i32, i32
  }
  func.func @transform_6(%arg0: i32) -> (i32, i32) {
    %c0_i32 = arith.constant 0 : i32
    %c0_i32_0 = arith.constant 0 : i32
    %c0_i32_1 = arith.constant 0 : i32
    return %c0_i32, %c0_i32_0 : i32, i32
  }
  func.func @transform_7(%arg0: i32) -> (i32, i32) {
    %c0_i32 = arith.constant 0 : i32
    %c0_i32_0 = arith.constant 0 : i32
    %c0_i32_1 = arith.constant 0 : i32
    return %c0_i32, %c0_i32_0 : i32, i32
  }
  func.func @transform_8(%arg0: i32) -> (i32, i32) {
    %c0_i32 = arith.constant 0 : i32
    %c0_i32_0 = arith.constant 0 : i32
    %c0_i32_1 = arith.constant 0 : i32
    return %c0_i32, %c0_i32_0 : i32, i32
  }
  func.func @transform_9(%arg0: i32) -> (i32, i32) {
    %c0_i32 = arith.constant 0 : i32
    %c0_i32_0 = arith.constant 0 : i32
    %c0_i32_1 = arith.constant 0 : i32
    return %c0_i32, %c0_i32_0 : i32, i32
  }
  func.func @transform_10(%arg0: i32) -> (i32, i32) {
    %c0_i32 = arith.constant 0 : i32
    %c0_i32_0 = arith.constant 0 : i32
    %c0_i32_1 = arith.constant 0 : i32
    return %c0_i32, %c0_i32_0 : i32, i32
  }
  func.func @transform_11(%arg0: i32) -> (i32, i32) {
    %c0_i32 = arith.constant 0 : i32
    %c0_i32_0 = arith.constant 0 : i32
    %c0_i32_1 = arith.constant 0 : i32
    return %c0_i32, %c0_i32_0 : i32, i32
  }
  func.func @transform_12(%arg0: i32) -> (i32, i32) {
    %c0_i32 = arith.constant 0 : i32
    %c0_i32_0 = arith.constant 0 : i32
    %c0_i32_1 = arith.constant 0 : i32
    return %c0_i32, %c0_i32_0 : i32, i32
  }
  func.func @transform_13(%arg0: i32) -> (i32, i32) {
    %c0_i32 = arith.constant 0 : i32
    %c0_i32_0 = arith.constant 0 : i32
    %c0_i32_1 = arith.constant 0 : i32
    return %c0_i32, %c0_i32_0 : i32, i32
  }
  func.func @transform_14(%arg0: i32) -> (i32, i32) {
    %c0_i32 = arith.constant 0 : i32
    %c0_i32_0 = arith.constant 0 : i32
    return %arg0, %c0_i32 : i32, i32
  }
  func.func @transform_15(%arg0: i32) -> (i32, i32) {
    %c0_i32 = arith.constant 0 : i32
    %c0_i32_0 = arith.constant 0 : i32
    return %arg0, %c0_i32 : i32, i32
  }
}

</mosaic_0001>

<llo_original>
// kernel: tpu_custom_call.1
$region0: #{tpu_custom_call.1}
  #allocation0 [shape = 'u32[]', space=smem, size = 0x4, offset = 0x4, fixed_abs, tag = 'smem constant byte address 0x4 - core index']
  #allocation1 [shape = 'u32[144,128]{1,0:T(1,128)}', space=vmem, size = 0x12000, scoped, tag = 'internal scratch']
  %s0 = inlined_call_operand.hbm [shape: bf16[8,128], index: 0, kind: input, shape index: {}]
  %s1 = inlined_call_operand.hbm [shape: bf16[8,128], index: 1, kind: input, shape index: {}]
  %s2 = inlined_call_operand.hbm [shape: bf16[128,128], index: 2, kind: input, shape index: {}]
  %s3 = inlined_call_operand.vmem [shape: f32[1,128], index: 3, kind: input, shape index: {}]
  %s4 = inlined_call_operand.hbm [shape: bf16[128,128], index: 4, kind: input, shape index: {}]
  %s5 = inlined_call_operand.vmem [shape: f32[1,128], index: 5, kind: input, shape index: {}]
  %s6 = inlined_call_operand.hbm [shape: bf16[128,256], index: 6, kind: input, shape index: {}]
  %s7 = inlined_call_operand.vmem [shape: f32[1,256], index: 7, kind: input, shape index: {}]
  %s8 = inlined_call_operand.hbm [shape: bf16[128,128], index: 8, kind: input, shape index: {}]
  %s9 = inlined_call_operand.vmem [shape: f32[1,128], index: 9, kind: input, shape index: {}]
  %s10 = inlined_call_operand.hbm [shape: bf16[128,128], index: 10, kind: input, shape index: {}]
  %s11 = inlined_call_operand.vmem [shape: f32[1,128], index: 11, kind: input, shape index: {}]
  %s12 = inlined_call_operand.hbm [shape: bf16[128,128], index: 12, kind: input, shape index: {}]
  %s13 = inlined_call_operand.vmem [shape: f32[1,128], index: 13, kind: input, shape index: {}]
  %s14 = inlined_call_operand.hbm [shape: bf16[8,128], index: 14, kind: output, shape index: {0}]
  %s15 = inlined_call_operand.hbm [shape: f32[8,256], index: 15, kind: output, shape index: {1}]
  %16 = xla_tuple %s14, %s15
  %s17 = sld [smem:[#allocation0]]
  $region106: #{tpu_custom_call.1} parent=0
    _
  %s19 = ssub.s32 1, %s17
  %s20 = scalar_select 0, %s19, %s17
  $region1: #{tpu_custom_call.1} parent=0
    #allocation2 [shape = 'u8[2048]{0}', space=vmem, size = 0x800, scoped, tag = 'input window, operand 0, single buffered']
    #allocation3 [shape = 's32[1]{0}', space=sflag, size = 0x4, scoped, tag = 'scoped memory for tpu_custom_call.1']
    #allocation4 [shape = 's32[1]{0}', space=sflag, size = 0x4, scoped, tag = 'scoped memory for tpu_custom_call.1']
    #allocation5 [shape = 'u8[2048]{0}', space=vmem, size = 0x800, scoped, tag = 'input window, operand 1, single buffered']
    #allocation6 [shape = 's32[1]{0}', space=sflag, size = 0x4, scoped, tag = 'scoped memory for tpu_custom_call.1']
    #allocation7 [shape = 'u8[32768]{0}', space=vmem, size = 0x8000, scoped, tag = 'input window, operand 2, single buffered']
    #allocation8 [shape = 'u8[32768]{0}', space=vmem, size = 0x8000, scoped, tag = 'input window, operand 4, single buffered']
    #allocation9 [shape = 's32[1]{0}', space=sflag, size = 0x4, scoped, tag = 'scoped memory for tpu_custom_call.1']
    #allocation10 [shape = 'u8[65536]{0}', space=vmem, size = 0x10000, scoped, tag = 'input window, operand 6, single buffered']
    #allocation11 [shape = 'u8[32768]{0}', space=vmem, size = 0x8000, scoped, tag = 'input window, operand 8, single buffered']
    #allocation12 [shape = 's32[1]{0}', space=sflag, size = 0x4, scoped, tag = 'scoped memory for tpu_custom_call.1']
    #allocation13 [shape = 'u8[32768]{0}', space=vmem, size = 0x8000, scoped, tag = 'input window, operand 10, single buffered']
    #allocation14 [shape = 'u8[32768]{0}', space=vmem, size = 0x8000, scoped, tag = 'input window, operand 12, single buffered']
    #allocation15 [shape = 's32[1]{0}', space=sflag, size = 0x4, scoped, tag = 'scoped memory for tpu_custom_call.1']
    #allocation16 [shape = 'u8[2048]{0}', space=vmem, size = 0x800, scoped, tag = 'output window, operand 0, single buffered']
    #allocation17 [shape = 'u8[8192]{0}', space=vmem, size = 0x2000, scoped, tag = 'output window, operand 1, single buffered']
    #allocation18 [shape = 's32[1]{0}', space=sflag, size = 0x4, scoped, tag = 'scoped memory for tpu_custom_call.1']
    %21 = vsyncpa [#allocation3], 0
    %22 = vsyncpa [#allocation6], 0
    %23 = vsyncpa [#allocation9], 0
    %24 = vsyncpa [#allocation12], 0
    %25 = vsyncpa [#allocation15], 0
    %26 = vsyncpa [#allocation4], 0
    %27 = vsyncpa [#allocation18], 0
    // Predicated region
    $region2: #{tpu_custom_call.1} parent=1 // pred_check
      _
    $region3: #{tpu_custom_call.1} parent=1 // pred_check_branch
      %29 = sbr.rel (0) target = $region5
    $region4: #{tpu_custom_call.1} parent=1 // pred_region
      %s31 = ssub.s32 64, 64
      %32 = vsyncadd [#allocation3], %s31
      %s34 = sshll.u32 [#allocation2], 4
      %s35 = int_to_ptr.vmem [resolvable:$true] %s34
      %37 = dma.hbm_to_vmem [thread:$0]  %s0, 64, %s35, [#allocation3]
    $region5: #{tpu_custom_call.1} parent=1 // pred_fallthru
      _
    // Predicated region
    $region6: #{tpu_custom_call.1} parent=1 // pred_check
      _
    $region7: #{tpu_custom_call.1} parent=1 // pred_check_branch
      %39 = sbr.rel (0) target = $region9
    $region8: #{tpu_custom_call.1} parent=1 // pred_region
      %s41 = ssub.s32 64, 64
      %42 = vsyncadd [#allocation6], %s41
      %s44 = sshll.u32 [#allocation5], 4
      %s45 = int_to_ptr.vmem [resolvable:$true] %s44
      %47 = dma.hbm_to_vmem [thread:$0]  %s1, 64, %s45, [#allocation6]
    $region9: #{tpu_custom_call.1} parent=1 // pred_fallthru
      _
    // Predicated region
    $region10: #{tpu_custom_call.1} parent=1 // pred_check
      _
    $region11: #{tpu_custom_call.1} parent=1 // pred_check_branch
      %49 = sbr.rel (0) target = $region13
    $region12: #{tpu_custom_call.1} parent=1 // pred_region
      %s51 = ssub.s32 1024, 1024
      %52 = vsyncadd [#allocation6], %s51
      %s53 = sshll.u32 [#allocation7], 4
      %s54 = int_to_ptr.vmem [resolvable:$true] %s53
      %59 = dma.hbm_to_vmem [thread:$0]  %s2, 1024, %s54, [#allocation6], 64, 64, 4
    $region13: #{tpu_custom_call.1} parent=1 // pred_fallthru
      _
    // Predicated region
    $region14: #{tpu_custom_call.1} parent=1 // pred_check
      _
    $region15: #{tpu_custom_call.1} parent=1 // pred_check_branch
      %61 = sbr.rel (0) target = $region17
    $region16: #{tpu_custom_call.1} parent=1 // pred_region
      _
    $region17: #{tpu_custom_call.1} parent=1 // pred_fallthru
      _
    // Predicated region
    $region18: #{tpu_custom_call.1} parent=1 // pred_check
      _
    $region19: #{tpu_custom_call.1} parent=1 // pred_check_branch
      %63 = sbr.rel (0) target = $region21
    $region20: #{tpu_custom_call.1} parent=1 // pred_region
      %s65 = ssub.s32 1024, 1024
      %66 = vsyncadd [#allocation9], %s65
      %s67 = sshll.u32 [#allocation8], 4
      %s68 = int_to_ptr.vmem [resolvable:$true] %s67
      %73 = dma.hbm_to_vmem [thread:$0]  %s4, 1024, %s68, [#allocation9], 64, 64, 4
    $region21: #{tpu_custom_call.1} parent=1 // pred_fallthru
      _
    // Predicated region
    $region22: #{tpu_custom_call.1} parent=1 // pred_check
      _
    $region23: #{tpu_custom_call.1} parent=1 // pred_check_branch
      %75 = sbr.rel (0) target = $region25
    $region24: #{tpu_custom_call.1} parent=1 // pred_region
      _
    $region25: #{tpu_custom_call.1} parent=1 // pred_fallthru
      _
    // Predicated region
    $region26: #{tpu_custom_call.1} parent=1 // pred_check
      _
    $region27: #{tpu_custom_call.1} parent=1 // pred_check_branch
      %77 = sbr.rel (0) target = $region29
    $region28: #{tpu_custom_call.1} parent=1 // pred_region
      %s79 = ssub.s32 2048, 2048
      %80 = vsyncadd [#allocation9], %s79
      %s81 = sshll.u32 [#allocation10], 4
      %s82 = int_to_ptr.vmem [resolvable:$true] %s81
      %87 = dma.hbm_to_vmem [thread:$0]  %s6, 2048, %s82, [#allocation9], 128, 128, 8
    $region29: #{tpu_custom_call.1} parent=1 // pred_fallthru
      _
    // Predicated region
    $region30: #{tpu_custom_call.1} parent=1 // pred_check
      _
    $region31: #{tpu_custom_call.1} parent=1 // pred_check_branch
      %89 = sbr.rel (0) target = $region33
    $region32: #{tpu_custom_call.1} parent=1 // pred_region
      _
    $region33: #{tpu_custom_call.1} parent=1 // pred_fallthru
      _
    // Predicated region
    $region34: #{tpu_custom_call.1} parent=1 // pred_check
      _
    $region35: #{tpu_custom_call.1} parent=1 // pred_check_branch
      %91 = sbr.rel (0) target = $region37
    $region36: #{tpu_custom_call.1} parent=1 // pred_region
      %s93 = ssub.s32 1024, 1024
      %94 = vsyncadd [#allocation12], %s93
      %s95 = sshll.u32 [#allocation11], 4
      %s96 = int_to_ptr.vmem [resolvable:$true] %s95
      %101 = dma.hbm_to_vmem [thread:$0]  %s8, 1024, %s96, [#allocation12], 64, 64, 4
    $region37: #{tpu_custom_call.1} parent=1 // pred_fallthru
      _
    // Predicated region
    $region38: #{tpu_custom_call.1} parent=1 // pred_check
      _
    $region39: #{tpu_custom_call.1} parent=1 // pred_check_branch
      %103 = sbr.rel (0) target = $region41
    $region40: #{tpu_custom_call.1} parent=1 // pred_region
      _
    $region41: #{tpu_custom_call.1} parent=1 // pred_fallthru
      _
    // Predicated region
    $region42: #{tpu_custom_call.1} parent=1 // pred_check
      _
    $region43: #{tpu_custom_call.1} parent=1 // pred_check_branch
      %105 = sbr.rel (0) target = $region45
    $region44: #{tpu_custom_call.1} parent=1 // pred_region
      %s107 = ssub.s32 1024, 1024
      %108 = vsyncadd [#allocation12], %s107
      %s109 = sshll.u32 [#allocation13], 4
      %s110 = int_to_ptr.vmem [resolvable:$true] %s109
      %115 = dma.hbm_to_vmem [thread:$0]  %s10, 1024, %s110, [#allocation12], 64, 64, 4
    $region45: #{tpu_custom_call.1} parent=1 // pred_fallthru
      _
    // Predicated region
    $region46: #{tpu_custom_call.1} parent=1 // pred_check
      _
    $region47: #{tpu_custom_call.1} parent=1 // pred_check_branch
      %117 = sbr.rel (0) target = $region49
    $region48: #{tpu_custom_call.1} parent=1 // pred_region
      _
    $region49: #{tpu_custom_call.1} parent=1 // pred_fallthru
      _
    // Predicated region
    $region50: #{tpu_custom_call.1} parent=1 // pred_check
      _
    $region51: #{tpu_custom_call.1} parent=1 // pred_check_branch
      %119 = sbr.rel (0) target = $region53
    $region52: #{tpu_custom_call.1} parent=1 // pred_region
      %s121 = ssub.s32 1024, 1024
      %122 = vsyncadd [#allocation15], %s121
      %s123 = sshll.u32 [#allocation14], 4
      %s124 = int_to_ptr.vmem [resolvable:$true] %s123
      %129 = dma.hbm_to_vmem [thread:$0]  %s12, 1024, %s124, [#allocation15], 64, 64, 4
    $region53: #{tpu_custom_call.1} parent=1 // pred_fallthru
      _
    // Predicated region
    $region54: #{tpu_custom_call.1} parent=1 // pred_check
      _
    $region55: #{tpu_custom_call.1} parent=1 // pred_check_branch
      %131 = sbr.rel (0) target = $region57
    $region56: #{tpu_custom_call.1} parent=1 // pred_region
      _
    $region57: #{tpu_custom_call.1} parent=1 // pred_fallthru
      _
    // Predicated region
    $region58: #{tpu_custom_call.1} parent=1 // pred_check
      _
    $region59: #{tpu_custom_call.1} parent=1 // pred_check_branch
      %133 = sbr.rel (0) target = $region61
    $region60: #{tpu_custom_call.1} parent=1 // pred_region
      %134 = dma.done [#allocation3], 64
    $region61: #{tpu_custom_call.1} parent=1 // pred_fallthru
      _
    // Predicated region
    $region62: #{tpu_custom_call.1} parent=1 // pred_check
      _
    $region63: #{tpu_custom_call.1} parent=1 // pred_check_branch
      %136 = sbr.rel (0) target = $region65
    $region64: #{tpu_custom_call.1} parent=1 // pred_region
      %137 = dma.done [#allocation6], 64
    $region65: #{tpu_custom_call.1} parent=1 // pred_fallthru
      _
    // Predicated region
    $region66: #{tpu_custom_call.1} parent=1 // pred_check
      _
    $region67: #{tpu_custom_call.1} parent=1 // pred_check_branch
      %139 = sbr.rel (0) target = $region69
    $region68: #{tpu_custom_call.1} parent=1 // pred_region
      %140 = dma.done [#allocation6], 1024
    $region69: #{tpu_custom_call.1} parent=1 // pred_fallthru
      _
    // Predicated region
    $region70: #{tpu_custom_call.1} parent=1 // pred_check
      _
    $region71: #{tpu_custom_call.1} parent=1 // pred_check_branch
      %142 = sbr.rel (0) target = $region73
    $region72: #{tpu_custom_call.1} parent=1 // pred_region
      %143 = dma.done [#allocation9], 1024
    $region73: #{tpu_custom_call.1} parent=1 // pred_fallthru
      _
    // Predicated region
    $region74: #{tpu_custom_call.1} parent=1 // pred_check
      _
    $region75: #{tpu_custom_call.1} parent=1 // pred_check_branch
      %145 = sbr.rel (0) target = $region77
    $region76: #{tpu_custom_call.1} parent=1 // pred_region
      %146 = dma.done [#allocation9], 2048
    $region77: #{tpu_custom_call.1} parent=1 // pred_fallthru
      _
    // Predicated region
    $region78: #{tpu_custom_call.1} parent=1 // pred_check
      _
    $region79: #{tpu_custom_call.1} parent=1 // pred_check_branch
      %148 = sbr.rel (0) target = $region81
    $region80: #{tpu_custom_call.1} parent=1 // pred_region
      %149 = dma.done [#allocation12], 1024
    $region81: #{tpu_custom_call.1} parent=1 // pred_fallthru
      _
    // Predicated region
    $region82: #{tpu_custom_call.1} parent=1 // pred_check
      _
    $region83: #{tpu_custom_call.1} parent=1 // pred_check_branch
      %151 = sbr.rel (0) target = $region85
    $region84: #{tpu_custom_call.1} parent=1 // pred_region
      %152 = dma.done [#allocation12], 1024
    $region85: #{tpu_custom_call.1} parent=1 // pred_fallthru
      _
    // Predicated region
    $region86: #{tpu_custom_call.1} parent=1 // pred_check
      _
    $region87: #{tpu_custom_call.1} parent=1 // pred_check_branch
      %154 = sbr.rel (0) target = $region89
    $region88: #{tpu_custom_call.1} parent=1 // pred_region
      %155 = dma.done [#allocation15], 1024
    $region89: #{tpu_custom_call.1} parent=1 // pred_fallthru
      _
    %v157 = vld [vmem:[#allocation2] sm:$0xf]
    %v158 = vld [vmem:[#allocation7] sm:$0xf]
    %v159 = vld [vmem:[#allocation7 + $0x4] sm:$0xf]
    %v160 = vld [vmem:[#allocation7 + $0x8] sm:$0xf]
    %v161 = vld [vmem:[#allocation7 + $0xc] sm:$0xf]
    %v162 = vld [vmem:[#allocation7 + $0x10] sm:$0xf]
    %v163 = vld [vmem:[#allocation7 + $0x14] sm:$0xf]
    %v164 = vld [vmem:[#allocation7 + $0x18] sm:$0xf]
    %v165 = vld [vmem:[#allocation7 + $0x1c] sm:$0xf]
    %v166 = vld [vmem:[#allocation7 + $0x20] sm:$0xf]
    %v167 = vld [vmem:[#allocation7 + $0x24] sm:$0xf]
    %v168 = vld [vmem:[#allocation7 + $0x28] sm:$0xf]
    %v169 = vld [vmem:[#allocation7 + $0x2c] sm:$0xf]
    %v170 = vld [vmem:[#allocation7 + $0x30] sm:$0xf]
    %v171 = vld [vmem:[#allocation7 + $0x34] sm:$0xf]
    %v172 = vld [vmem:[#allocation7 + $0x38] sm:$0xf]
    %v173 = vld [vmem:[#allocation7 + $0x3c] sm:$0xf]
    %v174 = vld [vmem:[%s3] sm:$0x1]
    %v176 = vlaneseq
    %v177 = vshrl.u32 %v176, 7
    %v178 = vsub.s32 0, %v177
    %v179 = vrot.slane %v174, %v178
    %v197 = vunpack.c.l.b16 %v158
    %v198 = vunpack.c.l.b16 %v159
    %v199 = vunpack.c.l.b16 %v160
    %v200 = vunpack.c.l.b16 %v161
    %v201 = vunpack.c.l.b16 %v162
    %v202 = vunpack.c.l.b16 %v163
    %v203 = vunpack.c.l.b16 %v164
    %v204 = vunpack.c.l.b16 %v165
    %v205 = vunpack.c.l.b16 %v166
    %v206 = vunpack.c.l.b16 %v167
    %v207 = vunpack.c.l.b16 %v168
    %v208 = vunpack.c.l.b16 %v169
    %v209 = vunpack.c.l.b16 %v170
    %v210 = vunpack.c.l.b16 %v171
    %v211 = vunpack.c.l.b16 %v172
    %v212 = vunpack.c.l.b16 %v173
    %v213 = vpack.c.b16 %v198, %v197
    %v214 = vpack.c.b16 %v200, %v199
    %v215 = vpack.c.b16 %v202, %v201
    %v216 = vpack.c.b16 %v204, %v203
    %v217 = vpack.c.b16 %v206, %v205
    %v218 = vpack.c.b16 %v208, %v207
    %v219 = vpack.c.b16 %v210, %v209
    %v220 = vpack.c.b16 %v212, %v211
    %229 = vmatprep.subr.bf16.mxu0 0
    %230 = vmatpush1.bf16.msra.mxu0 %v213
    %231 = vmatprep.subr.bf16.mxu0 0
    %232 = vmatpush1.bf16.msra.mxu0 %v214
    %233 = vmatprep.subr.bf16.mxu0 0
    %234 = vmatpush1.bf16.msra.mxu0 %v215
    %235 = vmatprep.subr.bf16.mxu0 0
    %236 = vmatpush1.bf16.msra.mxu0 %v216
    %237 = vmatprep.subr.bf16.mxu0 0
    %238 = vmatpush1.bf16.msra.mxu0 %v217
    %239 = vmatprep.subr.bf16.mxu0 0
    %240 = vmatpush1.bf16.msra.mxu0 %v218
    %241 = vmatprep.subr.bf16.mxu0 0
    %242 = vmatpush1.bf16.msra.mxu0 %v219
    %243 = vmatprep.subr.bf16.mxu0 0
    %244 = vmatpush1.bf16.msra.mxu0 %v220
    %245 = vmatprep.subr.bf16.mxu0 0
    %246 = vmatpush1.bf16.msra.mxu0 0
    %247 = vmatprep.subr.bf16.mxu0 0
    %248 = vmatpush1.bf16.msra.mxu0 0
    %249 = vmatprep.subr.bf16.mxu0 0
    %250 = vmatpush1.bf16.msra.mxu0 0
    %251 = vmatprep.subr.bf16.mxu0 0
    %252 = vmatpush1.bf16.msra.mxu0 0
    %253 = vmatprep.subr.bf16.mxu0 0
    %254 = vmatpush1.bf16.msra.mxu0 0
    %255 = vmatprep.subr.bf16.mxu0 0
    %256 = vmatpush1.bf16.msra.mxu0 0
    %257 = vmatprep.subr.bf16.mxu0 0
    %258 = vmatpush1.bf16.msra.mxu0 0
    %259 = vmatprep.subr.bf16.mxu0 0
    %260 = vmatpush1.bf16.msra.mxu0 0
    %261 = vmatprep.mubr.bf16.mxu0 0
    %262 = vmatmul.mubr.bf16.gmra.mrb[0].mxu0 %v157
    %v263 = vpop.f32.mrb[0].mxu0
    %v264 = vadd.f32 %v179, %v263
    %v265 = vpop.f32.mrb[0].mxu0
    %v266 = vpop.f32.mrb[0].mxu0
    %v267 = vpop.f32.mrb[0].mxu0
    %268 = vdwg.mxu0
    %vm269 = vcmp.gt.f32.partialorder %v264, 0.0
    %v270 = vmul.f32 %v264, 0.01
    %v271 = vsel %vm269, %v264, %v270
    %v272 = vpack.c.bf16 %v271, %v271
    %v273 = vld [vmem:[#allocation8] sm:$0xf]
    %v274 = vld [vmem:[#allocation8 + $0x4] sm:$0xf]
    %v275 = vld [vmem:[#allocation8 + $0x8] sm:$0xf]
    %v276 = vld [vmem:[#allocation8 + $0xc] sm:$0xf]
    %v277 = vld [vmem:[#allocation8 + $0x10] sm:$0xf]
    %v278 = vld [vmem:[#allocation8 + $0x14] sm:$0xf]
    %v279 = vld [vmem:[#allocation8 + $0x18] sm:$0xf]
    %v280 = vld [vmem:[#allocation8 + $0x1c] sm:$0xf]
    %v281 = vld [vmem:[#allocation8 + $0x20] sm:$0xf]
    %v282 = vld [vmem:[#allocation8 + $0x24] sm:$0xf]
    %v283 = vld [vmem:[#allocation8 + $0x28] sm:$0xf]
    %v284 = vld [vmem:[#allocation8 + $0x2c] sm:$0xf]
    %v285 = vld [vmem:[#allocation8 + $0x30] sm:$0xf]
    %v286 = vld [vmem:[#allocation8 + $0x34] sm:$0xf]
    %v287 = vld [vmem:[#allocation8 + $0x38] sm:$0xf]
    %v288 = vld [vmem:[#allocation8 + $0x3c] sm:$0xf]
    %v289 = vld [vmem:[%s5] sm:$0x1]
    %v291 = vlaneseq
    %v292 = vshrl.u32 %v291, 7
    %v293 = vsub.s32 0, %v292
    %v294 = vrot.slane %v289, %v293
    %v312 = vunpack.c.l.b16 %v273
    %v313 = vunpack.c.l.b16 %v274
    %v314 = vunpack.c.l.b16 %v275
    %v315 = vunpack.c.l.b16 %v276
    %v316 = vunpack.c.l.b16 %v277
    %v317 = vunpack.c.l.b16 %v278
    %v318 = vunpack.c.l.b16 %v279
    %v319 = vunpack.c.l.b16 %v280
    %v320 = vunpack.c.l.b16 %v281
    %v321 = vunpack.c.l.b16 %v282
    %v322 = vunpack.c.l.b16 %v283
    %v323 = vunpack.c.l.b16 %v284
    %v324 = vunpack.c.l.b16 %v285
    %v325 = vunpack.c.l.b16 %v286
    %v326 = vunpack.c.l.b16 %v287
    %v327 = vunpack.c.l.b16 %v288
    %v328 = vpack.c.b16 %v313, %v312
    %v329 = vpack.c.b16 %v315, %v314
    %v330 = vpack.c.b16 %v317, %v316
    %v331 = vpack.c.b16 %v319, %v318
    %v332 = vpack.c.b16 %v321, %v320
    %v333 = vpack.c.b16 %v323, %v322
    %v334 = vpack.c.b16 %v325, %v324
    %v335 = vpack.c.b16 %v327, %v326
    %344 = vmatprep.subr.bf16.mxu0 0
    %345 = vmatpush1.bf16.msra.mxu0 %v328
    %346 = vmatprep.subr.bf16.mxu0 0
    %347 = vmatpush1.bf16.msra.mxu0 %v329
    %348 = vmatprep.subr.bf16.mxu0 0
    %349 = vmatpush1.bf16.msra.mxu0 %v330
    %350 = vmatprep.subr.bf16.mxu0 0
    %351 = vmatpush1.bf16.msra.mxu0 %v331
    %352 = vmatprep.subr.bf16.mxu0 0
    %353 = vmatpush1.bf16.msra.mxu0 %v332
    %354 = vmatprep.subr.bf16.mxu0 0
    %355 = vmatpush1.bf16.msra.mxu0 %v333
    %356 = vmatprep.subr.bf16.mxu0 0
    %357 = vmatpush1.bf16.msra.mxu0 %v334
    %358 = vmatprep.subr.bf16.mxu0 0
    %359 = vmatpush1.bf16.msra.mxu0 %v335
    %360 = vmatprep.subr.bf16.mxu0 0
    %361 = vmatpush1.bf16.msra.mxu0 0
    %362 = vmatprep.subr.bf16.mxu0 0
    %363 = vmatpush1.bf16.msra.mxu0 0
    %364 = vmatprep.subr.bf16.mxu0 0
    %365 = vmatpush1.bf16.msra.mxu0 0
    %366 = vmatprep.subr.bf16.mxu0 0
    %367 = vmatpush1.bf16.msra.mxu0 0
    %368 = vmatprep.subr.bf16.mxu0 0
    %369 = vmatpush1.bf16.msra.mxu0 0
    %370 = vmatprep.subr.bf16.mxu0 0
    %371 = vmatpush1.bf16.msra.mxu0 0
    %372 = vmatprep.subr.bf16.mxu0 0
    %373 = vmatpush1.bf16.msra.mxu0 0
    %374 = vmatprep.subr.bf16.mxu0 0
    %375 = vmatpush1.bf16.msra.mxu0 0
    %376 = vmatprep.mubr.bf16.mxu0 0
    %377 = vmatmul.mubr.bf16.gmra.mrb[0].mxu0 %v272
    %v378 = vpop.f32.mrb[0].mxu0
    %v379 = vadd.f32 %v294, %v378
    %v380 = vpop.f32.mrb[0].mxu0
    %v381 = vpop.f32.mrb[0].mxu0
    %v382 = vpop.f32.mrb[0].mxu0
    %383 = vdwg.mxu0
    %vm384 = vcmp.gt.f32.partialorder %v379, 0.0
    %v385 = vmul.f32 %v379, 0.01
    %v386 = vsel %vm384, %v379, %v385
    %v387 = vpack.c.bf16 %v386, %v386
    %v388 = vld [vmem:[#allocation10] sm:$0xff]
    %v389 = vld [vmem:[#allocation10 + $0x8] sm:$0xff]
    %v390 = vld [vmem:[#allocation10 + $0x10] sm:$0xff]
    %v391 = vld [vmem:[#allocation10 + $0x18] sm:$0xff]
    %v392 = vld [vmem:[#allocation10 + $0x20] sm:$0xff]
    %v393 = vld [vmem:[#allocation10 + $0x28] sm:$0xff]
    %v394 = vld [vmem:[#allocation10 + $0x30] sm:$0xff]
    %v395 = vld [vmem:[#allocation10 + $0x38] sm:$0xff]
    %v396 = vld [vmem:[#allocation10 + $0x40] sm:$0xff]
    %v397 = vld [vmem:[#allocation10 + $0x48] sm:$0xff]
    %v398 = vld [vmem:[#allocation10 + $0x50] sm:$0xff]
    %v399 = vld [vmem:[#allocation10 + $0x58] sm:$0xff]
    %v400 = vld [vmem:[#allocation10 + $0x60] sm:$0xff]
    %v401 = vld [vmem:[#allocation10 + $0x68] sm:$0xff]
    %v402 = vld [vmem:[#allocation10 + $0x70] sm:$0xff]
    %v403 = vld [vmem:[#allocation10 + $0x78] sm:$0xff]
    %v404 = vld [vmem:[%s7] sm:$0x3]
    %v406 = vlaneseq
    %v407 = vshrl.u32 %v406, 7
    %v408 = vsub.s32 0, %v407
    %v409 = vrot.slane %v404, %v408
    %v410 = vlaneseq
    %v411 = vshrl.u32 %v410, 7
    %v412 = vsub.s32 1, %v411
    %v413 = vrot.slane %v404, %v412
    %v432 = vunpack.c.l.b16 %v388
    %v433 = vunpack.c.h.b16 %v388
    %v434 = vunpack.c.l.b16 %v389
    %v435 = vunpack.c.h.b16 %v389
    %v436 = vunpack.c.l.b16 %v390
    %v437 = vunpack.c.h.b16 %v390
    %v438 = vunpack.c.l.b16 %v391
    %v439 = vunpack.c.h.b16 %v391
    %v440 = vunpack.c.l.b16 %v392
    %v441 = vunpack.c.h.b16 %v392
    %v442 = vunpack.c.l.b16 %v393
    %v443 = vunpack.c.h.b16 %v393
    %v444 = vunpack.c.l.b16 %v394
    %v445 = vunpack.c.h.b16 %v394
    %v446 = vunpack.c.l.b16 %v395
    %v447 = vunpack.c.h.b16 %v395
    %v448 = vunpack.c.l.b16 %v396
    %v449 = vunpack.c.h.b16 %v396
    %v450 = vunpack.c.l.b16 %v397
    %v451 = vunpack.c.h.b16 %v397
    %v452 = vunpack.c.l.b16 %v398
    %v453 = vunpack.c.h.b16 %v398
    %v454 = vunpack.c.l.b16 %v399
    %v455 = vunpack.c.h.b16 %v399
    %v456 = vunpack.c.l.b16 %v400
    %v457 = vunpack.c.h.b16 %v400
    %v458 = vunpack.c.l.b16 %v401
    %v459 = vunpack.c.h.b16 %v401
    %v460 = vunpack.c.l.b16 %v402
    %v461 = vunpack.c.h.b16 %v402
    %v462 = vunpack.c.l.b16 %v403
    %v463 = vunpack.c.h.b16 %v403
    %v464 = vpack.c.b16 %v434, %v432
    %v465 = vpack.c.b16 %v435, %v433
    %v466 = vpack.c.b16 %v438, %v436
    %v467 = vpack.c.b16 %v439, %v437
    %v468 = vpack.c.b16 %v442, %v440
    %v469 = vpack.c.b16 %v443, %v441
    %v470 = vpack.c.b16 %v446, %v444
    %v471 = vpack.c.b16 %v447, %v445
    %v472 = vpack.c.b16 %v450, %v448
    %v473 = vpack.c.b16 %v451, %v449
    %v474 = vpack.c.b16 %v454, %v452
    %v475 = vpack.c.b16 %v455, %v453
    %v476 = vpack.c.b16 %v458, %v456
    %v477 = vpack.c.b16 %v459, %v457
    %v478 = vpack.c.b16 %v462, %v460
    %v479 = vpack.c.b16 %v463, %v461
    %496 = vmatprep.subr.bf16.mxu0 %v465
    %497 = vmatpush1.bf16.msra.mxu0 %v464
    %498 = vmatprep.subr.bf16.mxu0 %v467
    %499 = vmatpush1.bf16.msra.mxu0 %v466
    %500 = vmatprep.subr.bf16.mxu0 %v469
    %501 = vmatpush1.bf16.msra.mxu0 %v468
    %502 = vmatprep.subr.bf16.mxu0 %v471
    %503 = vmatpush1.bf16.msra.mxu0 %v470
    %504 = vmatprep.subr.bf16.mxu0 %v473
    %505 = vmatpush1.bf16.msra.mxu0 %v472
    %506 = vmatprep.subr.bf16.mxu0 %v475
    %507 = vmatpush1.bf16.msra.mxu0 %v474
    %508 = vmatprep.subr.bf16.mxu0 %v477
    %509 = vmatpush1.bf16.msra.mxu0 %v476
    %510 = vmatprep.subr.bf16.mxu0 %v479
    %511 = vmatpush1.bf16.msra.mxu0 %v478
    %512 = vmatprep.subr.bf16.mxu0 0
    %513 = vmatpush1.bf16.msra.mxu0 0
    %514 = vmatprep.subr.bf16.mxu0 0
    %515 = vmatpush1.bf16.msra.mxu0 0
    %516 = vmatprep.subr.bf16.mxu0 0
    %517 = vmatpush1.bf16.msra.mxu0 0
    %518 = vmatprep.subr.bf16.mxu0 0
    %519 = vmatpush1.bf16.msra.mxu0 0
    %520 = vmatprep.subr.bf16.mxu0 0
    %521 = vmatpush1.bf16.msra.mxu0 0
    %522 = vmatprep.subr.bf16.mxu0 0
    %523 = vmatpush1.bf16.msra.mxu0 0
    %524 = vmatprep.subr.bf16.mxu0 0
    %525 = vmatpush1.bf16.msra.mxu0 0
    %526 = vmatprep.subr.bf16.mxu0 0
    %527 = vmatpush1.bf16.msra.mxu0 0
    %528 = vmatprep.mubr.bf16.mxu0 0
    %529 = vmatmul.mubr.bf16.gmra.mrb[0].mxu0 %v387
    %v530 = vpop.f32.mrb[0].mxu0
    %v531 = vadd.f32 %v409, %v530
    %v532 = vpop.f32.mrb[0].mxu0
    %v533 = vadd.f32 %v413, %v532
    %v534 = vpop.f32.mrb[0].mxu0
    %v535 = vpop.f32.mrb[0].mxu0
    %536 = vdwg.mxu0
    %537 = vst [vmem:[#allocation17] sm:$0xff] %v531
    %538 = vst [vmem:[#allocation17 + $0x8] sm:$0xff] %v533
    %v539 = vmul.f32 %v533, 0.5
    %v540 = vmul.f32 %v539, 1.442695
    %v541 = vpow.pop %v540
    %v542 = vld [vmem:[#allocation5] sm:$0xf]
    %v543 = vunpack.c.l.bf16 %v542
    %v544 = vmul.f32 %v541, %v543
    %v545 = vadd.f32 %v531, %v544
    %v546 = vpack.c.bf16 %v545, %v545
    %v547 = vld [vmem:[#allocation11] sm:$0xf]
    %v548 = vld [vmem:[#allocation11 + $0x4] sm:$0xf]
    %v549 = vld [vmem:[#allocation11 + $0x8] sm:$0xf]
    %v550 = vld [vmem:[#allocation11 + $0xc] sm:$0xf]
    %v551 = vld [vmem:[#allocation11 + $0x10] sm:$0xf]
    %v552 = vld [vmem:[#allocation11 + $0x14] sm:$0xf]
    %v553 = vld [vmem:[#allocation11 + $0x18] sm:$0xf]
    %v554 = vld [vmem:[#allocation11 + $0x1c] sm:$0xf]
    %v555 = vld [vmem:[#allocation11 + $0x20] sm:$0xf]
    %v556 = vld [vmem:[#allocation11 + $0x24] sm:$0xf]
    %v557 = vld [vmem:[#allocation11 + $0x28] sm:$0xf]
    %v558 = vld [vmem:[#allocation11 + $0x2c] sm:$0xf]
    %v559 = vld [vmem:[#allocation11 + $0x30] sm:$0xf]
    %v560 = vld [vmem:[#allocation11 + $0x34] sm:$0xf]
    %v561 = vld [vmem:[#allocation11 + $0x38] sm:$0xf]
    %v562 = vld [vmem:[#allocation11 + $0x3c] sm:$0xf]
    %v563 = vld [vmem:[%s9] sm:$0x1]
    %v565 = vlaneseq
    %v566 = vshrl.u32 %v565, 7
    %v567 = vsub.s32 0, %v566
    %v568 = vrot.slane %v563, %v567
    %v586 = vunpack.c.l.b16 %v547
    %v587 = vunpack.c.l.b16 %v548
    %v588 = vunpack.c.l.b16 %v549
    %v589 = vunpack.c.l.b16 %v550
    %v590 = vunpack.c.l.b16 %v551
    %v591 = vunpack.c.l.b16 %v552
    %v592 = vunpack.c.l.b16 %v553
    %v593 = vunpack.c.l.b16 %v554
    %v594 = vunpack.c.l.b16 %v555
    %v595 = vunpack.c.l.b16 %v556
    %v596 = vunpack.c.l.b16 %v557
    %v597 = vunpack.c.l.b16 %v558
    %v598 = vunpack.c.l.b16 %v559
    %v599 = vunpack.c.l.b16 %v560
    %v600 = vunpack.c.l.b16 %v561
    %v601 = vunpack.c.l.b16 %v562
    %v602 = vpack.c.b16 %v587, %v586
    %v603 = vpack.c.b16 %v589, %v588
    %v604 = vpack.c.b16 %v591, %v590
    %v605 = vpack.c.b16 %v593, %v592
    %v606 = vpack.c.b16 %v595, %v594
    %v607 = vpack.c.b16 %v597, %v596
    %v608 = vpack.c.b16 %v599, %v598
    %v609 = vpack.c.b16 %v601, %v600
    %618 = vmatprep.subr.bf16.mxu0 0
    %619 = vmatpush1.bf16.msra.mxu0 %v602
    %620 = vmatprep.subr.bf16.mxu0 0
    %621 = vmatpush1.bf16.msra.mxu0 %v603
    %622 = vmatprep.subr.bf16.mxu0 0
    %623 = vmatpush1.bf16.msra.mxu0 %v604
    %624 = vmatprep.subr.bf16.mxu0 0
    %625 = vmatpush1.bf16.msra.mxu0 %v605
    %626 = vmatprep.subr.bf16.mxu0 0
    %627 = vmatpush1.bf16.msra.mxu0 %v606
    %628 = vmatprep.subr.bf16.mxu0 0
    %629 = vmatpush1.bf16.msra.mxu0 %v607
    %630 = vmatprep.subr.bf16.mxu0 0
    %631 = vmatpush1.bf16.msra.mxu0 %v608
    %632 = vmatprep.subr.bf16.mxu0 0
    %633 = vmatpush1.bf16.msra.mxu0 %v609
    %634 = vmatprep.subr.bf16.mxu0 0
    %635 = vmatpush1.bf16.msra.mxu0 0
    %636 = vmatprep.subr.bf16.mxu0 0
    %637 = vmatpush1.bf16.msra.mxu0 0
    %638 = vmatprep.subr.bf16.mxu0 0
    %639 = vmatpush1.bf16.msra.mxu0 0
    %640 = vmatprep.subr.bf16.mxu0 0
    %641 = vmatpush1.bf16.msra.mxu0 0
    %642 = vmatprep.subr.bf16.mxu0 0
    %643 = vmatpush1.bf16.msra.mxu0 0
    %644 = vmatprep.subr.bf16.mxu0 0
    %645 = vmatpush1.bf16.msra.mxu0 0
    %646 = vmatprep.subr.bf16.mxu0 0
    %647 = vmatpush1.bf16.msra.mxu0 0
    %648 = vmatprep.subr.bf16.mxu0 0
    %649 = vmatpush1.bf16.msra.mxu0 0
    %650 = vmatprep.mubr.bf16.mxu0 0
    %651 = vmatmul.mubr.bf16.gmra.mrb[0].mxu0 %v546
    %v652 = vpop.f32.mrb[0].mxu0
    %v653 = vadd.f32 %v568, %v652
    %v654 = vpop.f32.mrb[0].mxu0
    %v655 = vpop.f32.mrb[0].mxu0
    %v656 = vpop.f32.mrb[0].mxu0
    %657 = vdwg.mxu0
    %vm658 = vcmp.gt.f32.partialorder %v653, 0.0
    %v659 = vmul.f32 %v653, 0.01
    %v660 = vsel %vm658, %v653, %v659
    %v661 = vpack.c.bf16 %v660, %v660
    %v662 = vld [vmem:[#allocation13] sm:$0xf]
    %v663 = vld [vmem:[#allocation13 + $0x4] sm:$0xf]
    %v664 = vld [vmem:[#allocation13 + $0x8] sm:$0xf]
    %v665 = vld [vmem:[#allocation13 + $0xc] sm:$0xf]
    %v666 = vld [vmem:[#allocation13 + $0x10] sm:$0xf]
    %v667 = vld [vmem:[#allocation13 + $0x14] sm:$0xf]
    %v668 = vld [vmem:[#allocation13 + $0x18] sm:$0xf]
    %v669 = vld [vmem:[#allocation13 + $0x1c] sm:$0xf]
    %v670 = vld [vmem:[#allocation13 + $0x20] sm:$0xf]
    %v671 = vld [vmem:[#allocation13 + $0x24] sm:$0xf]
    %v672 = vld [vmem:[#allocation13 + $0x28] sm:$0xf]
    %v673 = vld [vmem:[#allocation13 + $0x2c] sm:$0xf]
    %v674 = vld [vmem:[#allocation13 + $0x30] sm:$0xf]
    %v675 = vld [vmem:[#allocation13 + $0x34] sm:$0xf]
    %v676 = vld [vmem:[#allocation13 + $0x38] sm:$0xf]
    %v677 = vld [vmem:[#allocation13 + $0x3c] sm:$0xf]
    %v678 = vld [vmem:[%s11] sm:$0x1]
    %v680 = vlaneseq
    %v681 = vshrl.u32 %v680, 7
    %v682 = vsub.s32 0, %v681
    %v683 = vrot.slane %v678, %v682
    %v701 = vunpack.c.l.b16 %v662
    %v702 = vunpack.c.l.b16 %v663
    %v703 = vunpack.c.l.b16 %v664
    %v704 = vunpack.c.l.b16 %v665
    %v705 = vunpack.c.l.b16 %v666
    %v706 = vunpack.c.l.b16 %v667
    %v707 = vunpack.c.l.b16 %v668
    %v708 = vunpack.c.l.b16 %v669
    %v709 = vunpack.c.l.b16 %v670
    %v710 = vunpack.c.l.b16 %v671
    %v711 = vunpack.c.l.b16 %v672
    %v712 = vunpack.c.l.b16 %v673
    %v713 = vunpack.c.l.b16 %v674
    %v714 = vunpack.c.l.b16 %v675
    %v715 = vunpack.c.l.b16 %v676
    %v716 = vunpack.c.l.b16 %v677
    %v717 = vpack.c.b16 %v702, %v701
    %v718 = vpack.c.b16 %v704, %v703
    %v719 = vpack.c.b16 %v706, %v705
    %v720 = vpack.c.b16 %v708, %v707
    %v721 = vpack.c.b16 %v710, %v709
    %v722 = vpack.c.b16 %v712, %v711
    %v723 = vpack.c.b16 %v714, %v713
    %v724 = vpack.c.b16 %v716, %v715
    %733 = vmatprep.subr.bf16.mxu0 0
    %734 = vmatpush1.bf16.msra.mxu0 %v717
    %735 = vmatprep.subr.bf16.mxu0 0
    %736 = vmatpush1.bf16.msra.mxu0 %v718
    %737 = vmatprep.subr.bf16.mxu0 0
    %738 = vmatpush1.bf16.msra.mxu0 %v719
    %739 = vmatprep.subr.bf16.mxu0 0
    %740 = vmatpush1.bf16.msra.mxu0 %v720
    %741 = vmatprep.subr.bf16.mxu0 0
    %742 = vmatpush1.bf16.msra.mxu0 %v721
    %743 = vmatprep.subr.bf16.mxu0 0
    %744 = vmatpush1.bf16.msra.mxu0 %v722
    %745 = vmatprep.subr.bf16.mxu0 0
    %746 = vmatpush1.bf16.msra.mxu0 %v723
    %747 = vmatprep.subr.bf16.mxu0 0
    %748 = vmatpush1.bf16.msra.mxu0 %v724
    %749 = vmatprep.subr.bf16.mxu0 0
    %750 = vmatpush1.bf16.msra.mxu0 0
    %751 = vmatprep.subr.bf16.mxu0 0
    %752 = vmatpush1.bf16.msra.mxu0 0
    %753 = vmatprep.subr.bf16.mxu0 0
    %754 = vmatpush1.bf16.msra.mxu0 0
    %755 = vmatprep.subr.bf16.mxu0 0
    %756 = vmatpush1.bf16.msra.mxu0 0
    %757 = vmatprep.subr.bf16.mxu0 0
    %758 = vmatpush1.bf16.msra.mxu0 0
    %759 = vmatprep.subr.bf16.mxu0 0
    %760 = vmatpush1.bf16.msra.mxu0 0
    %761 = vmatprep.subr.bf16.mxu0 0
    %762 = vmatpush1.bf16.msra.mxu0 0
    %763 = vmatprep.subr.bf16.mxu0 0
    %764 = vmatpush1.bf16.msra.mxu0 0
    %765 = vmatprep.mubr.bf16.mxu0 0
    %766 = vmatmul.mubr.bf16.gmra.mrb[0].mxu0 %v661
    %v767 = vpop.f32.mrb[0].mxu0
    %v768 = vadd.f32 %v683, %v767
    %v769 = vpop.f32.mrb[0].mxu0
    %v770 = vpop.f32.mrb[0].mxu0
    %v771 = vpop.f32.mrb[0].mxu0
    %772 = vdwg.mxu0
    %vm773 = vcmp.gt.f32.partialorder %v768, 0.0
    %v774 = vmul.f32 %v768, 0.01
    %v775 = vsel %vm773, %v768, %v774
    %v776 = vpack.c.bf16 %v775, %v775
    %v777 = vld [vmem:[#allocation14] sm:$0xf]
    %v778 = vld [vmem:[#allocation14 + $0x4] sm:$0xf]
    %v779 = vld [vmem:[#allocation14 + $0x8] sm:$0xf]
    %v780 = vld [vmem:[#allocation14 + $0xc] sm:$0xf]
    %v781 = vld [vmem:[#allocation14 + $0x10] sm:$0xf]
    %v782 = vld [vmem:[#allocation14 + $0x14] sm:$0xf]
    %v783 = vld [vmem:[#allocation14 + $0x18] sm:$0xf]
    %v784 = vld [vmem:[#allocation14 + $0x1c] sm:$0xf]
    %v785 = vld [vmem:[#allocation14 + $0x20] sm:$0xf]
    %v786 = vld [vmem:[#allocation14 + $0x24] sm:$0xf]
    %v787 = vld [vmem:[#allocation14 + $0x28] sm:$0xf]
    %v788 = vld [vmem:[#allocation14 + $0x2c] sm:$0xf]
    %v789 = vld [vmem:[#allocation14 + $0x30] sm:$0xf]
    %v790 = vld [vmem:[#allocation14 + $0x34] sm:$0xf]
    %v791 = vld [vmem:[#allocation14 + $0x38] sm:$0xf]
    %v792 = vld [vmem:[#allocation14 + $0x3c] sm:$0xf]
    %v793 = vld [vmem:[%s13] sm:$0x1]
    %v795 = vlaneseq
    %v796 = vshrl.u32 %v795, 7
    %v797 = vsub.s32 0, %v796
    %v798 = vrot.slane %v793, %v797
    %v816 = vunpack.c.l.b16 %v777
    %v817 = vunpack.c.l.b16 %v778
    %v818 = vunpack.c.l.b16 %v779
    %v819 = vunpack.c.l.b16 %v780
    %v820 = vunpack.c.l.b16 %v781
    %v821 = vunpack.c.l.b16 %v782
    %v822 = vunpack.c.l.b16 %v783
    %v823 = vunpack.c.l.b16 %v784
    %v824 = vunpack.c.l.b16 %v785
    %v825 = vunpack.c.l.b16 %v786
    %v826 = vunpack.c.l.b16 %v787
    %v827 = vunpack.c.l.b16 %v788
    %v828 = vunpack.c.l.b16 %v789
    %v829 = vunpack.c.l.b16 %v790
    %v830 = vunpack.c.l.b16 %v791
    %v831 = vunpack.c.l.b16 %v792
    %v832 = vpack.c.b16 %v817, %v816
    %v833 = vpack.c.b16 %v819, %v818
    %v834 = vpack.c.b16 %v821, %v820
    %v835 = vpack.c.b16 %v823, %v822
    %v836 = vpack.c.b16 %v825, %v824
    %v837 = vpack.c.b16 %v827, %v826
    %v838 = vpack.c.b16 %v829, %v828
    %v839 = vpack.c.b16 %v831, %v830
    %848 = vmatprep.subr.bf16.mxu0 0
    %849 = vmatpush1.bf16.msra.mxu0 %v832
    %850 = vmatprep.subr.bf16.mxu0 0
    %851 = vmatpush1.bf16.msra.mxu0 %v833
    %852 = vmatprep.subr.bf16.mxu0 0
    %853 = vmatpush1.bf16.msra.mxu0 %v834
    %854 = vmatprep.subr.bf16.mxu0 0
    %855 = vmatpush1.bf16.msra.mxu0 %v835
    %856 = vmatprep.subr.bf16.mxu0 0
    %857 = vmatpush1.bf16.msra.mxu0 %v836
    %858 = vmatprep.subr.bf16.mxu0 0
    %859 = vmatpush1.bf16.msra.mxu0 %v837
    %860 = vmatprep.subr.bf16.mxu0 0
    %861 = vmatpush1.bf16.msra.mxu0 %v838
    %862 = vmatprep.subr.bf16.mxu0 0
    %863 = vmatpush1.bf16.msra.mxu0 %v839
    %864 = vmatprep.subr.bf16.mxu0 0
    %865 = vmatpush1.bf16.msra.mxu0 0
    %866 = vmatprep.subr.bf16.mxu0 0
    %867 = vmatpush1.bf16.msra.mxu0 0
    %868 = vmatprep.subr.bf16.mxu0 0
    %869 = vmatpush1.bf16.msra.mxu0 0
    %870 = vmatprep.subr.bf16.mxu0 0
    %871 = vmatpush1.bf16.msra.mxu0 0
    %872 = vmatprep.subr.bf16.mxu0 0
    %873 = vmatpush1.bf16.msra.mxu0 0
    %874 = vmatprep.subr.bf16.mxu0 0
    %875 = vmatpush1.bf16.msra.mxu0 0
    %876 = vmatprep.subr.bf16.mxu0 0
    %877 = vmatpush1.bf16.msra.mxu0 0
    %878 = vmatprep.subr.bf16.mxu0 0
    %879 = vmatpush1.bf16.msra.mxu0 0
    %880 = vmatprep.mubr.bf16.mxu0 0
    %881 = vmatmul.mubr.bf16.gmra.mrb[0].mxu0 %v776
    %v882 = vpop.f32.mrb[0].mxu0
    %v883 = vadd.f32 %v798, %v882
    %v884 = vpop.f32.mrb[0].mxu0
    %v885 = vpop.f32.mrb[0].mxu0
    %v886 = vpop.f32.mrb[0].mxu0
    %887 = vdwg.mxu0
    %v888 = vxor.u32 %v883, 2147483648
    %v889 = vmul.f32 %v888, 1.442695
    %v890 = vpow.pop %v889
    %v891 = vadd.f32 %v890, 1.0
    %v892 = vrcp.pop %v891
    %v893 = vmul.f32 1.0, %v892
    %v894 = vpack.c.bf16 %v893, %v893
    %895 = vst [vmem:[#allocation16] sm:$0xf] %v894
    // Predicated region
    $region90: #{tpu_custom_call.1} parent=1 // pred_check
      _
    $region91: #{tpu_custom_call.1} parent=1 // pred_check_branch
      %897 = sbr.rel (0) target = $region93
    $region92: #{tpu_custom_call.1} parent=1 // pred_region
      %s899 = ssub.s32 64, 64
      %900 = vsyncadd [#allocation4], %s899
      %s902 = sshll.u32 [#allocation16], 4
      %s903 = int_to_ptr.vmem [resolvable:$true] %s902
      %905 = dma.vmem_to_hbm [thread:$0]  %s903, 64, %s14, [#allocation4]
    $region93: #{tpu_custom_call.1} parent=1 // pred_fallthru
      _
    // Predicated region
    $region94: #{tpu_custom_call.1} parent=1 // pred_check
      _
    $region95: #{tpu_custom_call.1} parent=1 // pred_check_branch
      %907 = sbr.rel (0) target = $region97
    $region96: #{tpu_custom_call.1} parent=1 // pred_region
      %s909 = ssub.s32 256, 256
      %910 = vsyncadd [#allocation18], %s909
      %s912 = sshll.u32 [#allocation17], 4
      %s913 = int_to_ptr.vmem [resolvable:$true] %s912
      %915 = dma.vmem_to_hbm [thread:$0]  %s913, 256, %s15, [#allocation18]
    $region97: #{tpu_custom_call.1} parent=1 // pred_fallthru
      _
    // Predicated region
    $region98: #{tpu_custom_call.1} parent=1 // pred_check
      _
    $region99: #{tpu_custom_call.1} parent=1 // pred_check_branch
      %917 = sbr.rel (0) target = $region101
    $region100: #{tpu_custom_call.1} parent=1 // pred_region
      %918 = dma.done [#allocation4], 64
    $region101: #{tpu_custom_call.1} parent=1 // pred_fallthru
      _
    // Predicated region
    $region102: #{tpu_custom_call.1} parent=1 // pred_check
      _
    $region103: #{tpu_custom_call.1} parent=1 // pred_check_branch
      %920 = sbr.rel (0) target = $region105
    $region104: #{tpu_custom_call.1} parent=1 // pred_region
      %921 = dma.done [#allocation18], 256
    $region105: #{tpu_custom_call.1} parent=1 // pred_fallthru
      _
    %922 = vsyncpa [#allocation3], 1
    %923 = vsyncpa [#allocation6], 1
    %924 = vsyncpa [#allocation9], 1
    %925 = vsyncpa [#allocation12], 1
    %926 = vsyncpa [#allocation15], 1
    %927 = vsyncpa [#allocation4], 1
    %928 = vsyncpa [#allocation18], 1

</llo_original>
